<compile_context>
chip_gen: v6e
topology: v6e:2x2x1
jax: 0.10.0
libtpu: 0.0.40
codegen_flags: <defaults>
</compile_context>

<pallas_src>
import functools

import jax
import jax.numpy as jnp
from jax.experimental import pallas as pl
from jax.experimental.pallas import tpu as pltpu

BN_EPS = 1e-5


# ---------------------------------------------------------------------------
# Stage 1: adaptive average pool (spatial mean) over native (B, C, HW).
# ---------------------------------------------------------------------------
def _pool_kernel(x_ref, o_ref, *, inv_hw):
    # x_ref: (tb, C, thw) native dtype; o_ref: (tb, C) f32, resident across the
    # spatial (reduction) grid axis -> used directly as the accumulator.
    s = pl.program_id(1)

    @pl.when(s == 0)
    def _():
        o_ref[...] = jnp.zeros_like(o_ref)

    # Upcast per tile (keeps the HBM stream narrow); lane-axis reduce (XLU).
    o_ref[...] += jnp.sum(x_ref[...].astype(jnp.float32), axis=-1)

    @pl.when(s == pl.num_programs(1) - 1)
    def _():
        # Fold the 1/(H*W) scale into a single finalize multiply.
        o_ref[...] = o_ref[...] * inv_hw


# ---------------------------------------------------------------------------
# Stage 2: BatchNorm1d (training-mode batch stats) + ReLU + Linear.
# Needs the FULL batch of pooled features, so it runs after stage 1 completes.
# ---------------------------------------------------------------------------
def _bn_relu_linear_kernel(p_ref, gamma_ref, beta_ref, w_ref, b_ref, o_ref):
    pooled = p_ref[...]                                          # (B, C) f32
    mu = jnp.mean(pooled, axis=0, keepdims=True)                 # (1, C)
    var = jnp.mean(jnp.square(pooled - mu), axis=0, keepdims=True)  # biased
    h = (pooled - mu) * jax.lax.rsqrt(var + BN_EPS)
    h = h * gamma_ref[...] + beta_ref[...]
    h = jnp.maximum(h, 0.0)                                      # ReLU
    # bf16 MXU inputs with f32 accumulation (perf review): ~3x fewer MXU
    # passes on v5e, ~2x on v6e/v7x, and half the W DMA.  Slightly lossy vs
    # the f32 PyTorch matmul.
    out = jnp.dot(h.astype(w_ref.dtype), w_ref[...],
                  preferred_element_type=jnp.float32)
    o_ref[...] = (out + b_ref[...]).astype(o_ref.dtype)


# ---------------------------------------------------------------------------
# Tile-size helpers.
# ---------------------------------------------------------------------------
def _pick_lane_tile(dim, cap):
    """Largest multiple of 128 that divides `dim` and is <= cap; else the full
    dim (a block equal to the full array dim always satisfies the layout
    rule, e.g. HW = 49 for 7x7 feature maps)."""
    t = (min(cap, dim) // 128) * 128
    while t >= 128:
        if dim % t == 0:
            return t
        t -= 128
    return dim


def _pick_batch_tile(batch, per_row_bytes, budget):
    """Batch tile: must divide `batch` and (for the 2-D pooled output block)
    be a multiple of 8 or equal to the full batch.  Prefer tiles that give
    >= 2 grid steps (v7x megacore) while staying within the VMEM budget."""
    cap_budget = max(1, budget // max(1, per_row_bytes))
    # First pass: >= 2 batch tiles (both v7x TensorCores busy).
    for t in range(min(cap_budget, max(1, batch // 2)), 0, -1):
        if batch % t == 0 and t % 8 == 0:
            return t
    # Second pass: any multiple-of-8 divisor under the budget.
    for t in range(min(cap_budget, batch), 0, -1):
        if batch % t == 0 and t % 8 == 0:
            return t
    # Fallback: full batch (block == full dim satisfies the layout rule).
    return batch


def mlp_forward(x_nchw, gamma, beta, weight, bias):
    """x_nchw: (B, C, H, W); weight: (P, C) [PyTorch Linear layout]; bias: (P,)."""
    B, C, H, W = x_nchw.shape
    P = weight.shape[0]
    HW = H * W

    # Native layout for the kernel: (B, C, HW) — a pure reshape (no HBM copy).
    x3 = x_nchw.reshape(B, C, HW)
    itemsize = jnp.dtype(x3.dtype).itemsize

    # ~8 MiB per x buffer (double-buffered -> <= 16 MiB), HW on lanes.
    budget = 8 * 1024 * 1024
    thw = _pick_lane_tile(HW, max(128, budget // max(1, C * itemsize)))
    tb = _pick_batch_tile(B, C * thw * itemsize, budget)

    # Safety valve: if tb was forced to the full batch, shrink thw so the
    # block still fits the budget (when HW allows a 128-multiple divisor).
    if tb * C * thw * itemsize > budget and HW % 128 == 0:
        thw = _pick_lane_tile(HW, max(128, budget // max(1, tb * C * itemsize)))

    block_bytes = tb * C * thw * itemsize
    vmem_limit = min(64 * 1024 * 1024,
                     max(32 * 1024 * 1024, 2 * block_bytes + 2 * tb * C * 4 + (1 << 20)))

    pooled = pl.pallas_call(
        functools.partial(_pool_kernel, inv_hw=1.0 / float(HW)),
        out_shape=jax.ShapeDtypeStruct((B, C), jnp.float32),
        grid_spec=pltpu.PrefetchScalarGridSpec(
            num_scalar_prefetch=0,
            grid=(B // tb, HW // thw),
            in_specs=[pl.BlockSpec((tb, C, thw), lambda b, s: (b, 0, s))],
            out_specs=pl.BlockSpec((tb, C), lambda b, s: (b, 0)),
        ),
        compiler_params=pltpu.CompilerParams(
            dimension_semantics=("parallel", "arbitrary"),
            vmem_limit_bytes=vmem_limit,
        ),
    )(x3)

    # Pad the projection dim to a lane-dense multiple of 128; slice back after.
    p_pad = max(128, ((P + 127) // 128) * 128)
    w_t = jnp.zeros((C, p_pad), jnp.bfloat16).at[:, :P].set(
        jnp.transpose(weight).astype(jnp.bfloat16))
    b2 = jnp.zeros((1, p_pad), jnp.float32).at[:, :P].set(
        bias.reshape(1, P).astype(jnp.float32))
    gamma2 = gamma.reshape(1, C).astype(jnp.float32)
    beta2 = beta.reshape(1, C).astype(jnp.float32)

    # TODO(synk): for very large B on v7x (64 MiB VMEM), tile stage 2 over the
    # batch with a separate tiny stats kernel; monolithic is fine at these sizes.
    vmem = pl.BlockSpec(memory_space=pltpu.MemorySpace.VMEM)
    out_pad = pl.pallas_call(
        _bn_relu_linear_kernel,
        out_shape=jax.ShapeDtypeStruct((B, p_pad), x_nchw.dtype),
        in_specs=[vmem, vmem, vmem, vmem, vmem],
        out_specs=vmem,
        compiler_params=pltpu.CompilerParams(
            vmem_limit_bytes=32 * 1024 * 1024),
    )(pooled, gamma2, beta2, w_t, b2)

    return out_pad[:, :P]


def _reference(x_nchw, gamma, beta, weight, bias):
    pooled = jnp.mean(x_nchw.astype(jnp.float32), axis=(2, 3))
    mu = jnp.mean(pooled, axis=0, keepdims=True)
    var = jnp.mean((pooled - mu) ** 2, axis=0, keepdims=True)
    h = (pooled - mu) / jnp.sqrt(var + BN_EPS) * gamma[None, :] + beta[None, :]
    h = jnp.maximum(h, 0.0)
    return h @ weight.T + bias[None, :]


if __name__ == "__main__":
    # Small shapes consistent with the module: dim == C, projection_size == P.
    B, C, H, W = 2, 4, 16, 16
    P = 32  # projection_size

    key = jax.random.PRNGKey(0)
    kx, kg, kb, kw, kbias = jax.random.split(key, 5)

    x = jax.random.normal(kx, (B, C, H, W), dtype=jnp.float32)
    gamma = jax.random.normal(kg, (C,), dtype=jnp.float32) * 0.1 + 1.0
    beta = jax.random.normal(kb, (C,), dtype=jnp.float32) * 0.1
    weight = jax.random.normal(kw, (P, C), dtype=jnp.float32) * (1.0 / jnp.sqrt(C))
    bias = jax.random.normal(kbias, (P,), dtype=jnp.float32) * 0.1

    out = jax.block_until_ready(mlp_forward(x, gamma, beta, weight, bias))

    ref = _reference(x, gamma, beta, weight, bias)
    assert out.shape == (B, P)
    # bf16 MXU inputs (f32 accumulation) -> slightly relaxed tolerance.
    assert jnp.allclose(out, ref, atol=2e-2, rtol=2e-2), "mismatch vs reference"

    print("KERNEL_OK")
</pallas_src>

<mosaic_0001>
module attributes {stable_mosaic.version = 11 : i64} {
  func.func @_pool_kernel(%arg0: i32, %arg1: i32, %arg2: memref<2x4x256xf32, #tpu.memory_space<vmem>>, %arg3: memref<2x4xf32, #tpu.memory_space<vmem>>) attributes {dimension_semantics = [#tpu.dimension_semantics<parallel>, #tpu.dimension_semantics<arbitrary>], iteration_bounds = array<i64: 1, 1>, scalar_prefetch = 0 : i64, scratch_operands = 0 : i64, tpu.core_type = #tpu.core_type<tc>, window_params = [{transform_indices = @transform_0, window_bounds = array<i64: 2, 4, 256>}, {transform_indices = @transform_1, window_bounds = array<i64: 2, 4>}]} {
    %c0_i32 = arith.constant 0 : i32
    %0 = arith.cmpi eq, %arg1, %c0_i32 : i32
    %1 = arith.extui %0 : i1 to i32
    %c0_i32_0 = arith.constant 0 : i32
    %2 = arith.cmpi ne, %1, %c0_i32_0 : i32
    scf.if %2 {
      %cst_9 = arith.constant 0.000000e+00 : f32
      %11 = vector.broadcast %cst_9 : f32 to vector<2x4xf32>
      %c0_10 = arith.constant 0 : index
      %c0_11 = arith.constant 0 : index
      %12 = vector.load %arg3[%c0_10, %c0_11] : memref<2x4xf32, #tpu.memory_space<vmem>>, vector<2x4xf32>
      tpu.vector_store %arg3[%c0_10, %c0_11], %11 {strides = array<i32>} : memref<2x4xf32, #tpu.memory_space<vmem>>, vector<2x4xf32>,
    } else {
    }
    %c0 = arith.constant 0 : index
    %c0_1 = arith.constant 0 : index
    %3 = vector.load %arg3[%c0, %c0_1] : memref<2x4xf32, #tpu.memory_space<vmem>>, vector<2x4xf32>
    %c0_2 = arith.constant 0 : index
    %c0_3 = arith.constant 0 : index
    %c0_4 = arith.constant 0 : index
    %4 = vector.load %arg2[%c0_2, %c0_3, %c0_4] : memref<2x4x256xf32, #tpu.memory_space<vmem>>, vector<2x4x256xf32>
    %cst = arith.constant dense<0.000000e+00> : vector<2x4xf32>
    %5 = vector.multi_reduction <add>, %4, %cst [2] : vector<2x4x256xf32> to vector<2x4xf32>
    %6 = arith.addf %3, %5 : vector<2x4xf32>
    %c0_5 = arith.constant 0 : index
    %c0_6 = arith.constant 0 : index
    %7 = vector.load %arg3[%c0_5, %c0_6] : memref<2x4xf32, #tpu.memory_space<vmem>>, vector<2x4xf32>
    tpu.vector_store %arg3[%c0_5, %c0_6], %6 {strides = array<i32>} : memref<2x4xf32, #tpu.memory_space<vmem>>, vector<2x4xf32>,
    %c0_i32_7 = arith.constant 0 : i32
    %8 = arith.cmpi eq, %arg1, %c0_i32_7 : i32
    %9 = arith.extui %8 : i1 to i32
    %c0_i32_8 = arith.constant 0 : i32
    %10 = arith.cmpi ne, %9, %c0_i32_8 : i32
    scf.if %10 {
      %c0_9 = arith.constant 0 : index
      %c0_10 = arith.constant 0 : index
      %11 = vector.load %arg3[%c0_9, %c0_10] : memref<2x4xf32, #tpu.memory_space<vmem>>, vector<2x4xf32>
      %cst_11 = arith.constant 3.906250e-03 : f32
      %12 = vector.broadcast %cst_11 : f32 to vector<2x4xf32>
      %13 = arith.mulf %11, %12 : vector<2x4xf32>
      %c0_12 = arith.constant 0 : index
      %c0_13 = arith.constant 0 : index
      %14 = vector.load %arg3[%c0_12, %c0_13] : memref<2x4xf32, #tpu.memory_space<vmem>>, vector<2x4xf32>
      tpu.vector_store %arg3[%c0_12, %c0_13], %13 {strides = array<i32>} : memref<2x4xf32, #tpu.memory_space<vmem>>, vector<2x4xf32>,
    } else {
    }
    return
  }
  func.func @transform_0(%arg0: i32, %arg1: i32) -> (i32, i32, i32) {
    %c0_i32 = arith.constant 0 : i32
    %c0_i32_0 = arith.constant 0 : i32
    return %arg0, %c0_i32, %arg1 : i32, i32, i32
  }
  func.func @transform_1(%arg0: i32, %arg1: i32) -> (i32, i32) {
    %c0_i32 = arith.constant 0 : i32
    %c0_i32_0 = arith.constant 0 : i32
    return %arg0, %c0_i32 : i32, i32
  }
}

</mosaic_0001>

<llo_original>
// kernel: tpu_custom_call.1
$region0: #{tpu_custom_call.1}
  #allocation0 [shape = 'u32[]', space=smem, size = 0x4, offset = 0x4, fixed_abs, tag = 'smem constant byte address 0x4 - core index']
  #allocation1 [shape = 'u32[144,128]{1,0:T(1,128)}', space=vmem, size = 0x12000, scoped, tag = 'internal scratch']
  %s0 = inlined_call_operand.hbm [shape: f32[2,4,256], index: 0, kind: input, shape index: {}]
  %s1 = inlined_call_operand.hbm [shape: f32[2,4], index: 1, kind: output, shape index: {}]
  %s2 = sld [smem:[#allocation0]]
  $region26: #{tpu_custom_call.1} parent=0
    _
  %s4 = ssub.s32 1, %s2
  %s5 = scalar_select 0, %s4, %s2
  $region1: #{tpu_custom_call.1} parent=0
    #allocation2 [shape = 'u8[8192]{0}', space=vmem, size = 0x2000, scoped, tag = 'input window, operand 0, single buffered']
    #allocation3 [shape = 's32[1]{0}', space=sflag, size = 0x4, scoped, tag = 'scoped memory for tpu_custom_call.1']
    #allocation4 [shape = 's32[1]{0}', space=sflag, size = 0x4, scoped, tag = 'scoped memory for tpu_custom_call.1']
    #allocation5 [shape = 'u8[1024]{0}', space=vmem, size = 0x400, scoped, tag = 'output window, operand 0, single buffered']
    %6 = vsyncpa [#allocation3], 0
    %7 = vsyncpa [#allocation4], 0
    // Predicated region
    $region2: #{tpu_custom_call.1} parent=1 // pred_check
      _
    $region3: #{tpu_custom_call.1} parent=1 // pred_check_branch
      %9 = sbr.rel (0) target = $region5
    $region4: #{tpu_custom_call.1} parent=1 // pred_region
      %s11 = ssub.s32 256, 256
      %12 = vsyncadd [#allocation3], %s11
      %s13 = sshll.u32 [#allocation2], 4
      %s14 = int_to_ptr.vmem [resolvable:$true] %s13
      %19 = dma.hbm_to_vmem [thread:$0]  %s0, 256, %s14, [#allocation3], 128, 128, 8
    $region5: #{tpu_custom_call.1} parent=1 // pred_fallthru
      _
    // Predicated region
    $region6: #{tpu_custom_call.1} parent=1 // pred_check
      _
    $region7: #{tpu_custom_call.1} parent=1 // pred_check_branch
      %21 = sbr.rel (0) target = $region9
    $region8: #{tpu_custom_call.1} parent=1 // pred_region
      %22 = dma.done [#allocation3], 256
    $region9: #{tpu_custom_call.1} parent=1 // pred_fallthru
      _
    %p23 = scmp.eq.s32.totalorder 0, 0
    // Predicated region
    $region10: #{tpu_custom_call.1} parent=1 // pred_check
      %p24 = pneg %p23
    $region11: #{tpu_custom_call.1} parent=1 // pred_check_branch
      %26 = sbr.rel (%p24) target = $region13
    $region12: #{tpu_custom_call.1} parent=1 // pred_region
      %vm27 = vcmask 25600
      %28 = vst.msk [vmem:[#allocation5] sm:$0x3] %vm27, 0.0
    $region13: #{tpu_custom_call.1} parent=1 // pred_fallthru
      _
    %v29 = vld [vmem:[#allocation5] sm:$0x3]
    %v30 = vld [vmem:[#allocation2] sm:$0xff]
    %v31 = vld [vmem:[#allocation2 + $0x8] sm:$0xff]
    %v34 = vcombine.high %v30, %v30
    %v35 = vcombine.high %v31, %v31
    %vm38 = vcmask 1043456
    %v39 = vsel %vm38, %v30, 0.0
    %v40 = vsel %vm38, %v34, 0.0
    %v41 = vadd.f32 %v39, %v40
    %42 = vadd.xlane.f32.xlu0 %v41
    %v43 = vpop.xlane.xlu0 %42
    %v44 = vsel %vm38, %v31, 0.0
    %v45 = vsel %vm38, %v35, 0.0
    %v46 = vadd.f32 %v44, %v45
    %47 = vadd.xlane.f32.xlu0 %v46
    %v48 = vpop.xlane.xlu0 %47
    %v51 = vlaneseq
    %v52 = vand.u32 %v51, 127
    %v53 = vlaneseq
    %v54 = vshrl.u32 %v53, 7
    %v55 = vsub.s32 %v52, %v54
    %v56 = vrot.slane %v43, %v55
    %v57 = vlaneseq
    %v58 = vshrl.u32 %v57, 7
    %v59 = vsub.s32 %v52, %v58
    %v60 = vrot.slane %v48, %v59
    %vm61 = vcmask 1041409
    %v62 = vsel %vm61, %v60, %v56
    %v64 = vadd.f32 %v29, %v62
    %vm65 = vcmask 25600
    %66 = vst.msk [vmem:[#allocation5] sm:$0x3] %vm65, %v64
    // Predicated region
    $region14: #{tpu_custom_call.1} parent=1 // pred_check
      %p67 = pneg %p23
    $region15: #{tpu_custom_call.1} parent=1 // pred_check_branch
      %69 = sbr.rel (%p67) target = $region17
    $region16: #{tpu_custom_call.1} parent=1 // pred_region
      %v70 = vld [vmem:[#allocation5] sm:$0x3]
      %v71 = vmul.f32 %v70, 0.00390625
      %72 = vst.msk [vmem:[#allocation5] sm:$0x3] %vm65, %v71
    $region17: #{tpu_custom_call.1} parent=1 // pred_fallthru
      _
    // Predicated region
    $region18: #{tpu_custom_call.1} parent=1 // pred_check
      _
    $region19: #{tpu_custom_call.1} parent=1 // pred_check_branch
      %74 = sbr.rel (0) target = $region21
    $region20: #{tpu_custom_call.1} parent=1 // pred_region
      %s76 = ssub.s32 32, 32
      %77 = vsyncadd [#allocation4], %s76
      %s79 = sshll.u32 [#allocation5], 4
      %s80 = int_to_ptr.vmem [resolvable:$true] %s79
      %82 = dma.vmem_to_hbm [thread:$0]  %s80, 32, %s1, [#allocation4]
    $region21: #{tpu_custom_call.1} parent=1 // pred_fallthru
      _
    // Predicated region
    $region22: #{tpu_custom_call.1} parent=1 // pred_check
      _
    $region23: #{tpu_custom_call.1} parent=1 // pred_check_branch
      %84 = sbr.rel (0) target = $region25
    $region24: #{tpu_custom_call.1} parent=1 // pred_region
      %85 = dma.done [#allocation4], 32
    $region25: #{tpu_custom_call.1} parent=1 // pred_fallthru
      _
    %86 = vsyncpa [#allocation3], 1
    %87 = vsyncpa [#allocation4], 1

</llo_original>
